<compile_context>
chip_gen: v6e
topology: v6e:2x2x1
jax: 0.10.0
libtpu: 0.0.40
codegen_flags: <defaults>
</compile_context>

<pallas_src>
import jax
import jax.numpy as jnp
from jax.experimental import pallas as pl
from jax.experimental.pallas import tpu as pltpu


def _round_up(x, m):
    return -(-x // m) * m


def _time_embed_kernel(t_ref, w1_ref, b1_ref, w2_ref, b2_ref, o_ref):
    # t_ref:  [TB, 1]            (one batch tile of the time scalars)
    # w1_ref: [1, Hp]   b1_ref: [1, Hp]
    # w2_ref: [Hp, TN]  b2_ref: [1, TN]
    # o_ref:  [TB, TN]
    t = t_ref[...]
    # Layer 1: K == 1 contraction == outer product -> VPU broadcast MAC + ReLU.
    h = jnp.maximum(t * w1_ref[...] + b1_ref[...], 0)
    # Layer 2: MXU matmul in the weights' storage dtype, f32 accumulation.
    o = jnp.dot(h.astype(w2_ref.dtype), w2_ref[...],
                preferred_element_type=jnp.float32)
    o_ref[...] = (o + b2_ref[...].astype(jnp.float32)).astype(o_ref.dtype)


def make_time_embedding(w1, b1, w2, b2, *, matmul_dtype=None):
    """One-time parameter prep; returns a jitted `t -> embedding` callable.

    w1: [input_dim, H]  b1: [H]   (input_dim must be 1, per the forward contract)
    w2: [H, H]          b2: [H]
    matmul_dtype: optional storage dtype for w2 (e.g. jnp.bfloat16) to use the
        MXU's native bf16 path; accumulation stays f32 either way.
    """
    in_dim, H = w1.shape
    assert in_dim == 1, "TimeEmbedding forward contract is t of shape [B, 1, 1]"
    assert w2.shape == (H, H) and b1.shape == (H,) and b2.shape == (H,)

    param_dtype = jnp.result_type(w1.dtype, b1.dtype, w2.dtype, b2.dtype)

    # Pad the hidden dim to a lane multiple only when H > 128 (lane-dense
    # stores + N tiling); tiny H keeps full-extent blocks with no padding.
    Hp = _round_up(H, 128) if H > 128 else H
    pad = Hp - H
    w1p = jnp.pad(w1, ((0, 0), (0, pad))) if pad else w1
    b1p = (jnp.pad(b1, ((0, pad),)) if pad else b1).reshape(1, Hp)
    w2p = jnp.pad(w2, ((0, pad), (0, pad))) if pad else w2
    b2p = (jnp.pad(b2, ((0, pad),)) if pad else b2).reshape(1, Hp)
    if matmul_dtype is not None:
        w2p = w2p.astype(matmul_dtype)

    # N tiling for layer 2: stream w2 in <=512-lane column blocks when H is
    # large so the per-buffer weight block stays well inside VMEM and its DMA
    # overlaps the MXU. (Hp is a multiple of 128 whenever Hp > 128.)
    tn = Hp
    if Hp > 512:
        for cand in (512, 384, 256, 128):
            if Hp % cand == 0:
                tn = cand
                break
    n_n = Hp // tn

    def apply(t):
        B, S, k = t.shape
        assert S == 1 and k == 1, "TimeEmbedding expects t of shape [B, 1, 1]"
        out_dtype = jnp.result_type(t.dtype, param_dtype)
        t2d = t.reshape(B, 1)

        # Batch tiling: big tiles (fewer grid steps, fuller MXU rows), split
        # into >= 2 tiles when possible so the 'parallel' axes feed both v7x
        # TensorCores.
        if B <= 8:
            block_b, Bp = B, B                      # single full-extent tile
        else:
            bb_cap = 512 if Hp <= 1024 else 256     # keep the h activation small
            block_b = min(bb_cap, _round_up(B, 8))
            if _round_up(B, block_b) // block_b < 2 and B >= 16:
                block_b = _round_up(-(-B // 2), 8)  # >= 2 tiles for both v7x TCs
            Bp = _round_up(B, block_b)
        if Bp != B:
            t2d = jnp.pad(t2d, ((0, Bp - B), (0, 0)))

        # Grid-invariant parameter blocks: single-buffered (no pointless
        # double-buffer of the resident weight). w2/b2 stream with the default
        # double-buffering only when they are N-tiled.
        resident = pl.Buffered(1)
        w2_mode = resident if n_n == 1 else None

        # Rough VMEM footprint; raise the scoped limit (v5e default 16 MiB)
        # only when needed, staying under v7x's 64 MiB physical VMEM.
        w2_bufs = 1 if n_n == 1 else 2
        est_vmem = (2 * block_b * t2d.dtype.itemsize
                    + Hp * (w1p.dtype.itemsize + b1p.dtype.itemsize)
                    + w2_bufs * Hp * tn * w2p.dtype.itemsize
                    + w2_bufs * tn * b2p.dtype.itemsize
                    + 2 * block_b * tn * out_dtype.itemsize
                    + block_b * Hp * 4)
        cp_kwargs = dict(dimension_semantics=("parallel", "parallel"))
        if est_vmem > (12 << 20):
            cp_kwargs["vmem_limit_bytes"] = int(min(2 * est_vmem + (8 << 20),
                                                    60 << 20))

        out = pl.pallas_call(
            _time_embed_kernel,
            out_shape=jax.ShapeDtypeStruct((Bp, Hp), out_dtype),
            grid_spec=pltpu.PrefetchScalarGridSpec(
                num_scalar_prefetch=0,
                grid=(Bp // block_b, n_n),
                in_specs=[
                    pl.BlockSpec((block_b, 1), lambda i, j: (i, 0)),   # t tile
                    pl.BlockSpec((1, Hp), lambda i, j: (0, 0),
                                 pipeline_mode=resident),              # w1
                    pl.BlockSpec((1, Hp), lambda i, j: (0, 0),
                                 pipeline_mode=resident),              # b1
                    pl.BlockSpec((Hp, tn), lambda i, j: (0, j),
                                 pipeline_mode=w2_mode),               # w2
                    pl.BlockSpec((1, tn), lambda i, j: (0, j),
                                 pipeline_mode=w2_mode),               # b2
                ],
                out_specs=pl.BlockSpec((block_b, tn), lambda i, j: (i, j)),
            ),
            compiler_params=pltpu.CompilerParams(**cp_kwargs),
        )(t2d, w1p, b1p, w2p, b2p)

        if Bp != B or Hp != H:
            out = out[:B, :H]
        return out.reshape(B, 1, H)

    return jax.jit(apply)


if __name__ == "__main__":
    B = 2
    input_dim = 1
    hidden_dim = 32

    key = jax.random.PRNGKey(0)
    k_t, k_w1, k_b1, k_w2, k_b2 = jax.random.split(key, 5)

    # Deterministic synthetic parameters (shapes from the nn.Linear layers).
    t = jax.random.normal(k_t, (B, 1, input_dim), dtype=jnp.float32)
    w1 = jax.random.normal(k_w1, (input_dim, hidden_dim), dtype=jnp.float32) * 0.1
    b1 = jax.random.normal(k_b1, (hidden_dim,), dtype=jnp.float32) * 0.1
    w2 = jax.random.normal(k_w2, (hidden_dim, hidden_dim), dtype=jnp.float32) * 0.1
    b2 = jax.random.normal(k_b2, (hidden_dim,), dtype=jnp.float32) * 0.1

    # Parameter prep (padding / dtype) happens once here, not per forward call.
    embed = make_time_embedding(w1, b1, w2, b2)
    out = jax.block_until_ready(embed(t))

    # Pure-JAX reference check of the forward semantics.
    t2d = t.reshape(B, input_dim)
    ref = jnp.maximum(t2d @ w1 + b1, 0.0) @ w2 + b2
    ref = ref.reshape(B, 1, hidden_dim)
    assert out.shape == (B, 1, hidden_dim)
    assert out.dtype == ref.dtype
    assert jnp.allclose(out, ref, atol=1e-5, rtol=1e-5)

    print("KERNEL_OK")
</pallas_src>

<mosaic_0001>
module attributes {stable_mosaic.version = 11 : i64} {
  func.func @_time_embed_kernel(%arg0: i32, %arg1: i32, %arg2: memref<2x1xf32, #tpu.memory_space<vmem>>, %arg3: memref<1x32xf32, #tpu.memory_space<vmem>>, %arg4: memref<1x32xf32, #tpu.memory_space<vmem>>, %arg5: memref<32x32xf32, #tpu.memory_space<vmem>>, %arg6: memref<1x32xf32, #tpu.memory_space<vmem>>, %arg7: memref<2x32xf32, #tpu.memory_space<vmem>>) attributes {dimension_semantics = [#tpu.dimension_semantics<parallel>, #tpu.dimension_semantics<parallel>], iteration_bounds = array<i64: 1, 1>, scalar_prefetch = 0 : i64, scratch_operands = 0 : i64, tpu.core_type = #tpu.core_type<tc>, window_params = [{transform_indices = @transform_0, window_bounds = array<i64: 2, 1>}, {pipeline_mode = #tpu.pipeline_mode<synchronous>, transform_indices = @transform_1, window_bounds = array<i64: 1, 32>}, {pipeline_mode = #tpu.pipeline_mode<synchronous>, transform_indices = @transform_2, window_bounds = array<i64: 1, 32>}, {pipeline_mode = #tpu.pipeline_mode<synchronous>, transform_indices = @transform_3, window_bounds = array<i64: 32, 32>}, {pipeline_mode = #tpu.pipeline_mode<synchronous>, transform_indices = @transform_4, window_bounds = array<i64: 1, 32>}, {transform_indices = @transform_5, window_bounds = array<i64: 2, 32>}]} {
    %c0 = arith.constant 0 : index
    %c0_0 = arith.constant 0 : index
    %0 = vector.load %arg2[%c0, %c0_0] : memref<2x1xf32, #tpu.memory_space<vmem>>, vector<2x1xf32>
    %c0_1 = arith.constant 0 : index
    %c0_2 = arith.constant 0 : index
    %1 = vector.load %arg3[%c0_1, %c0_2] : memref<1x32xf32, #tpu.memory_space<vmem>>, vector<1x32xf32>
    %2 = vector.broadcast %0 : vector<2x1xf32> to vector<2x32xf32>
    %3 = vector.broadcast %1 : vector<1x32xf32> to vector<2x32xf32>
    %4 = arith.mulf %2, %3 : vector<2x32xf32>
    %c0_3 = arith.constant 0 : index
    %c0_4 = arith.constant 0 : index
    %5 = vector.load %arg4[%c0_3, %c0_4] : memref<1x32xf32, #tpu.memory_space<vmem>>, vector<1x32xf32>
    %6 = vector.broadcast %5 : vector<1x32xf32> to vector<2x32xf32>
    %7 = arith.addf %4, %6 : vector<2x32xf32>
    %cst = arith.constant 0.000000e+00 : f32
    %8 = vector.broadcast %cst : f32 to vector<2x32xf32>
    %9 = arith.maximumf %7, %8 : vector<2x32xf32>
    %c0_5 = arith.constant 0 : index
    %c0_6 = arith.constant 0 : index
    %10 = vector.load %arg5[%c0_5, %c0_6] : memref<32x32xf32, #tpu.memory_space<vmem>>, vector<32x32xf32>
    %cst_7 = arith.constant dense<0.000000e+00> : vector<2x32xf32>
    %11 = tpu.matmul %9, %10, %cst_7 {dimension_numbers = #tpu.dot_dimension_numbers<[1], [0], [0], [1], [0, 0, 1, 1], [], []>} : vector<2x32xf32>, vector<32x32xf32>, vector<2x32xf32> -> vector<2x32xf32>
    %c0_8 = arith.constant 0 : index
    %c0_9 = arith.constant 0 : index
    %12 = vector.load %arg6[%c0_8, %c0_9] : memref<1x32xf32, #tpu.memory_space<vmem>>, vector<1x32xf32>
    %13 = vector.broadcast %12 : vector<1x32xf32> to vector<2x32xf32>
    %14 = arith.addf %11, %13 : vector<2x32xf32>
    %c0_10 = arith.constant 0 : index
    %c0_11 = arith.constant 0 : index
    %15 = vector.load %arg7[%c0_10, %c0_11] : memref<2x32xf32, #tpu.memory_space<vmem>>, vector<2x32xf32>
    tpu.vector_store %arg7[%c0_10, %c0_11], %14 {strides = array<i32>} : memref<2x32xf32, #tpu.memory_space<vmem>>, vector<2x32xf32>,
    return
  }
  func.func @transform_0(%arg0: i32, %arg1: i32) -> (i32, i32) {
    %c0_i32 = arith.constant 0 : i32
    %c0_i32_0 = arith.constant 0 : i32
    return %arg0, %c0_i32 : i32, i32
  }
  func.func @transform_1(%arg0: i32, %arg1: i32) -> (i32, i32) {
    %c0_i32 = arith.constant 0 : i32
    %c0_i32_0 = arith.constant 0 : i32
    %c0_i32_1 = arith.constant 0 : i32
    return %c0_i32, %c0_i32_0 : i32, i32
  }
  func.func @transform_2(%arg0: i32, %arg1: i32) -> (i32, i32) {
    %c0_i32 = arith.constant 0 : i32
    %c0_i32_0 = arith.constant 0 : i32
    %c0_i32_1 = arith.constant 0 : i32
    return %c0_i32, %c0_i32_0 : i32, i32
  }
  func.func @transform_3(%arg0: i32, %arg1: i32) -> (i32, i32) {
    %c0_i32 = arith.constant 0 : i32
    %c0_i32_0 = arith.constant 0 : i32
    return %c0_i32, %arg1 : i32, i32
  }
  func.func @transform_4(%arg0: i32, %arg1: i32) -> (i32, i32) {
    %c0_i32 = arith.constant 0 : i32
    %c0_i32_0 = arith.constant 0 : i32
    return %c0_i32, %arg1 : i32, i32
  }
  func.func @transform_5(%arg0: i32, %arg1: i32) -> (i32, i32) {
    %c0_i32 = arith.constant 0 : i32
    return %arg0, %arg1 : i32, i32
  }
}

</mosaic_0001>

<llo_original>
// kernel: apply.1
$region0: #{apply.1}
  #allocation0 [shape = 'u32[]', space=smem, size = 0x4, offset = 0x4, fixed_abs, tag = 'smem constant byte address 0x4 - core index']
  #allocation1 [shape = 'u32[144,128]{1,0:T(1,128)}', space=vmem, size = 0x12000, scoped, tag = 'internal scratch']
  %s0 = inlined_call_operand.vmem [shape: f32[2,1], index: 0, kind: input, shape index: {}]
  %s1 = inlined_call_operand.vmem [shape: f32[1,32], index: 1, kind: input, shape index: {}]
  %s2 = inlined_call_operand.vmem [shape: f32[1,32], index: 2, kind: input, shape index: {}]
  %s3 = inlined_call_operand.hbm [shape: f32[32,32], index: 3, kind: input, shape index: {}]
  %s4 = inlined_call_operand.vmem [shape: f32[1,32], index: 4, kind: input, shape index: {}]
  %s5 = inlined_call_operand.hbm [shape: f32[2,32], index: 5, kind: output, shape index: {}]
  %s6 = sld [smem:[#allocation0]]
  $region34: #{apply.1} parent=0
    _
  %s8 = ssub.s32 1, %s6
  %s9 = scalar_select 0, %s8, %s6
  $region1: #{apply.1} parent=0
    #allocation2 [shape = 'u8[16384]{0}', space=vmem, size = 0x4000, scoped, tag = 'input window, operand 3, single buffered']
    #allocation3 [shape = 's32[1]{0}', space=sflag, size = 0x4, scoped, tag = 'scoped memory for apply.1']
    #allocation4 [shape = 's32[1]{0}', space=sflag, size = 0x4, scoped, tag = 'scoped memory for apply.1']
    #allocation5 [shape = 'u8[1024]{0}', space=vmem, size = 0x400, scoped, tag = 'output window, operand 0, single buffered']
    %10 = vsyncpa [#allocation3], 0
    %11 = vsyncpa [#allocation4], 0
    // Predicated region
    $region2: #{apply.1} parent=1 // pred_check
      _
    $region3: #{apply.1} parent=1 // pred_check_branch
      %13 = sbr.rel (0) target = $region5
    $region4: #{apply.1} parent=1 // pred_region
      _
    $region5: #{apply.1} parent=1 // pred_fallthru
      _
    // Predicated region
    $region6: #{apply.1} parent=1 // pred_check
      _
    $region7: #{apply.1} parent=1 // pred_check_branch
      %15 = sbr.rel (0) target = $region9
    $region8: #{apply.1} parent=1 // pred_region
      _
    $region9: #{apply.1} parent=1 // pred_fallthru
      _
    // Predicated region
    $region10: #{apply.1} parent=1 // pred_check
      _
    $region11: #{apply.1} parent=1 // pred_check_branch
      %17 = sbr.rel (0) target = $region13
    $region12: #{apply.1} parent=1 // pred_region
      _
    $region13: #{apply.1} parent=1 // pred_fallthru
      _
    // Predicated region
    $region14: #{apply.1} parent=1 // pred_check
      _
    $region15: #{apply.1} parent=1 // pred_check_branch
      %19 = sbr.rel (0) target = $region17
    $region16: #{apply.1} parent=1 // pred_region
      %s21 = ssub.s32 512, 512
      %22 = vsyncadd [#allocation3], %s21
      %s23 = sshll.u32 [#allocation2], 4
      %s24 = int_to_ptr.vmem [resolvable:$true] %s23
      %29 = dma.hbm_to_vmem [thread:$0]  %s3, 512, %s24, [#allocation3], 128, 128, 8
    $region17: #{apply.1} parent=1 // pred_fallthru
      _
    // Predicated region
    $region18: #{apply.1} parent=1 // pred_check
      _
    $region19: #{apply.1} parent=1 // pred_check_branch
      %31 = sbr.rel (0) target = $region21
    $region20: #{apply.1} parent=1 // pred_region
      _
    $region21: #{apply.1} parent=1 // pred_fallthru
      _
    // Predicated region
    $region22: #{apply.1} parent=1 // pred_check
      _
    $region23: #{apply.1} parent=1 // pred_check_branch
      %33 = sbr.rel (0) target = $region25
    $region24: #{apply.1} parent=1 // pred_region
      %34 = dma.done [#allocation3], 512
    $region25: #{apply.1} parent=1 // pred_fallthru
      _
    %v35 = vld [vmem:[%s0] sm:$0x3]
    %v36 = vld [vmem:[%s1] sm:$0x1]
    %38 = vset.pattern.permute.xlu0 0
    %39 = vperm.xlu0 %38, %v35
    %v40 = vpop.permute.xlu0 %39
    %v43 = vlaneseq
    %v44 = vshrl.u32 %v43, 7
    %v45 = vsub.s32 0, %v44
    %v46 = vrot.slane %v36, %v45
    %v48 = vmul.f32 %v40, %v46
    %v49 = vld [vmem:[%s2] sm:$0x1]
    %v51 = vlaneseq
    %v52 = vshrl.u32 %v51, 7
    %v53 = vsub.s32 0, %v52
    %v54 = vrot.slane %v49, %v53
    %v56 = vadd.f32 %v48, %v54
    %v57 = vmax.f32 %v56, 0.0
    %v58 = vld [vmem:[#allocation2] sm:$0xff]
    %v59 = vld [vmem:[#allocation2 + $0x8] sm:$0xff]
    %v60 = vld [vmem:[#allocation2 + $0x10] sm:$0xff]
    %v61 = vld [vmem:[#allocation2 + $0x18] sm:$0xff]
    %v62 = vld [vmem:[%s4] sm:$0x1]
    %v64 = vlaneseq
    %v65 = vshrl.u32 %v64, 7
    %v66 = vsub.s32 0, %v65
    %v67 = vrot.slane %v62, %v66
    %vm69 = vcmask 261120
    %v71 = vsel %vm69, %v57, 0
    %73 = vmatprep.subr.mxu0 0.0
    %74 = vmatpush1.msra.mxu0 0.0
    %75 = vmatprep.subr.mxu0 0.0
    %76 = vmatpush1.msra.mxu0 0.0
    %77 = vmatprep.subr.mxu0 0.0
    %78 = vmatpush1.msra.mxu0 0.0
    %79 = vmatprep.subr.mxu0 0.0
    %80 = vmatpush1.msra.mxu0 0.0
    %81 = vmatprep.subr.mxu0 0.0
    %82 = vmatpush1.msra.mxu0 0.0
    %83 = vmatprep.subr.mxu0 0.0
    %84 = vmatpush1.msra.mxu0 0.0
    %85 = vmatprep.subr.mxu0 0.0
    %86 = vmatpush1.msra.mxu0 0.0
    %87 = vmatprep.subr.mxu0 0.0
    %88 = vmatpush1.msra.mxu0 0.0
    %89 = vmatprep.subr.mxu0 0.0
    %90 = vmatpush1.msra.mxu0 0.0
    %91 = vmatprep.subr.mxu0 0.0
    %92 = vmatpush1.msra.mxu0 0.0
    %93 = vmatprep.subr.mxu0 0.0
    %94 = vmatpush1.msra.mxu0 0.0
    %95 = vmatprep.subr.mxu0 0.0
    %96 = vmatpush1.msra.mxu0 0.0
    %97 = vmatprep.subr.mxu0 0.0
    %98 = vmatpush1.msra.mxu0 %v61
    %99 = vmatprep.subr.mxu0 0.0
    %100 = vmatpush1.msra.mxu0 %v60
    %101 = vmatprep.subr.mxu0 0.0
    %102 = vmatpush1.msra.mxu0 %v59
    %103 = vmatprep.subr.mxu0 0.0
    %104 = vmatpush1.msra.mxu0 %v58
    %105 = vmatprep.subr.mxu0 0.0
    %106 = vmatpush2.msra.mxu0 0.0
    %107 = vmatprep.subr.mxu0 0.0
    %108 = vmatpush2.msra.mxu0 0.0
    %109 = vmatprep.subr.mxu0 0.0
    %110 = vmatpush2.msra.mxu0 0.0
    %111 = vmatprep.subr.mxu0 0.0
    %112 = vmatpush2.msra.mxu0 0.0
    %113 = vmatprep.subr.mxu0 0.0
    %114 = vmatpush2.msra.mxu0 0.0
    %115 = vmatprep.subr.mxu0 0.0
    %116 = vmatpush2.msra.mxu0 0.0
    %117 = vmatprep.subr.mxu0 0.0
    %118 = vmatpush2.msra.mxu0 0.0
    %119 = vmatprep.subr.mxu0 0.0
    %120 = vmatpush2.msra.mxu0 0.0
    %121 = vmatprep.subr.mxu0 0.0
    %122 = vmatpush2.msra.mxu0 0.0
    %123 = vmatprep.subr.mxu0 0.0
    %124 = vmatpush2.msra.mxu0 0.0
    %125 = vmatprep.subr.mxu0 0.0
    %126 = vmatpush2.msra.mxu0 0.0
    %127 = vmatprep.subr.mxu0 0.0
    %128 = vmatpush2.msra.mxu0 0.0
    %129 = vmatprep.subr.mxu0 0.0
    %130 = vmatpush2.msra.mxu0 0.0
    %131 = vmatprep.subr.mxu0 0.0
    %132 = vmatpush2.msra.mxu0 0.0
    %133 = vmatprep.subr.mxu0 0.0
    %134 = vmatpush2.msra.mxu0 0.0
    %135 = vmatprep.subr.mxu0 0.0
    %136 = vmatpush2.msra.mxu0 0.0
    %137 = vmatprep.mubr.f32.mxu0 0.0
    %138 = vmatmul.mubr.f32.gmra.mxu0 %v71
    %v139 = vpop.f32.mrf.mxu0
    %v140 = vadd.f32 %v67, %v139
    %v141 = vpop.f32.mrf.mxu0
    %142 = vdwg.mxu0
    %vm143 = vcmask 254976
    %144 = vst.msk [vmem:[#allocation5] sm:$0x3] %vm143, %v140
    // Predicated region
    $region26: #{apply.1} parent=1 // pred_check
      _
    $region27: #{apply.1} parent=1 // pred_check_branch
      %146 = sbr.rel (0) target = $region29
    $region28: #{apply.1} parent=1 // pred_region
      %s148 = ssub.s32 32, 32
      %149 = vsyncadd [#allocation4], %s148
      %s151 = sshll.u32 [#allocation5], 4
      %s152 = int_to_ptr.vmem [resolvable:$true] %s151
      %154 = dma.vmem_to_hbm [thread:$0]  %s152, 32, %s5, [#allocation4]
    $region29: #{apply.1} parent=1 // pred_fallthru
      _
    // Predicated region
    $region30: #{apply.1} parent=1 // pred_check
      _
    $region31: #{apply.1} parent=1 // pred_check_branch
      %156 = sbr.rel (0) target = $region33
    $region32: #{apply.1} parent=1 // pred_region
      %157 = dma.done [#allocation4], 32
    $region33: #{apply.1} parent=1 // pred_fallthru
      _
    %158 = vsyncpa [#allocation3], 1
    %159 = vsyncpa [#allocation4], 1

</llo_original>
